<compile_context>
chip_gen: v7x
topology: tpu7x:2x2x1
jax: 0.10.0
libtpu: 0.0.40
codegen_flags: <defaults>
</compile_context>

<pallas_src>
import functools

import jax
import jax.numpy as jnp
import numpy as np
from jax import lax
from jax.experimental import pallas as pl
from jax.experimental.pallas import tpu as pltpu

ALPHA_RELU = 0.15
IN_EPS = 1e-5


def _conv_in_lrelu_kernel(gk_ref, w_ref, m_ref, o_ref, *, HW, pad, kw):
    # gk_ref: (1, kh*Cin, HW + 2*pad) bf16  pre-shifted per-ki planes (K-major)
    # w_ref : (kw, Cout_tile, kh*Cin) bf16  per-kj weight slabs, K = kh*Cin
    # m_ref : (kw, 1, HW) f32               per-kj column-validity masks
    # o_ref : (1, Cout_tile, HW)            output tile (lane-dense)
    acc = None
    for kj in range(kw):
        x_kj = gk_ref[0, :, kj:kj + HW]                      # (kh*Cin, HW) bf16
        part = jnp.dot(w_ref[kj], x_kj,
                       preferred_element_type=jnp.float32)   # (Cout_t, HW) f32
        if kj != pad:                    # center tap: mask is all-ones, skip it
            part = part * m_ref[kj]      # post-matmul masking, f32 side
        acc = part if acc is None else acc + part

    # InstanceNorm2d (affine=False): per-channel mean/biased-var over the lane
    # (spatial) axis.  Conv bias omitted on purpose: a per-channel constant is
    # cancelled exactly by this mean subtraction.
    mean = jnp.mean(acc, axis=1, keepdims=True)              # (Cout_t, 1)
    centered = acc - mean
    var = jnp.mean(centered * centered, axis=1, keepdims=True)
    normed = centered * lax.rsqrt(var + IN_EPS)

    # LeakyReLU(alpha=0.15)
    out = jnp.where(normed >= 0, normed, ALPHA_RELU * normed)
    o_ref[0] = out.astype(o_ref.dtype)


def _pick_cout_tile(Cout, khCin, HW, Lk, kw, budget_bytes=40 * 1024 * 1024):
    """Largest Cout tile fitting a ~40 MiB per-step VMEM budget (v7x-safe)."""
    fixed = 2 * khCin * Lk * 2 + kw * HW * 4            # dbl-buffered gk + masks
    per_c = 2 * HW * 4 + HW * 4 + 2 * kw * khCin * 2    # dbl-buf out + acc + weights
    tile = min(Cout, max(1, (budget_bytes - fixed) // per_c))
    if tile >= Cout:
        return Cout
    return max(8, (tile // 8) * 8)      # partial-block dims must be multiples of 8


def conv2d_layer(x, weight, bias=None, out_dtype=jnp.float32):
    """Conv2DLayer forward, default config: Conv2d(k=3, pad=1, stride=1, bias)
    -> InstanceNorm2d(affine=False) -> LeakyReLU(0.15).

    x: [N, Cin, H, W]; weight: [Cout, Cin, kh, kw]; bias: [Cout].
    The bias is accepted but unused: InstanceNorm's mean subtraction cancels a
    per-channel constant exactly.  This is only valid because the norm
    (affine=False) immediately follows the conv (norm_before=True, 'in2d');
    other layer variants must re-add the bias."""
    del bias
    N, Cin, H, W = x.shape
    Cout, Cin_w, kh, kw = weight.shape
    assert Cin_w == Cin and kh == kw and kh % 2 == 1, "expects odd square kernel"
    pad = kh // 2
    HW = H * W
    khCin = kh * Cin
    Lk = HW + 2 * pad

    # ---- pre-shifted per-ki planes stacked on the contraction axis ---------
    # gk[n, ki*Cin + c, q] = H-padded-flat[n, c, q + ki*W - pad]  (0 outside)
    xp = jnp.pad(x, ((0, 0), (0, 0), (pad, pad), (0, 0)))           # pad H only
    flat = xp.reshape(N, Cin, (H + 2 * pad) * W)
    flatp = jnp.pad(flat, ((0, 0), (0, 0), (pad, pad)))             # room for kj shift
    planes = [lax.slice_in_dim(flatp, ki * W, ki * W + Lk, axis=2)
              for ki in range(kh)]
    gk = jnp.stack(planes, axis=1).reshape(N, khCin, Lk).astype(jnp.bfloat16)

    # ---- per-kj weight slabs laid out to match gk's K ordering -------------
    # w3[kj, co, ki*Cin + c] = weight[co, c, ki, kj]
    w3 = jnp.transpose(weight, (3, 0, 2, 1)).reshape(kw, Cout, khCin)
    w3 = w3.astype(jnp.bfloat16)

    # ---- per-kj column validity masks (f32, applied post-matmul) -----------
    col = np.arange(HW) % W
    m_np = np.zeros((kw, 1, HW), np.float32)
    for kj in range(kw):
        m_np[kj, 0] = ((col + kj - pad >= 0) & (col + kj - pad < W)).astype(np.float32)
    masks = jnp.asarray(m_np)

    cout_tile = _pick_cout_tile(Cout, khCin, HW, Lk, kw)
    n_co = pl.cdiv(Cout, cout_tile)

    kernel = functools.partial(_conv_in_lrelu_kernel, HW=HW, pad=pad, kw=kw)

    cost = pl.CostEstimate(
        flops=2 * N * HW * Cin * kh * kw * Cout,
        transcendentals=0,
        bytes_accessed=(gk.size * 2 + w3.size * 2 + masks.size * 4
                        + N * Cout * HW * jnp.dtype(out_dtype).itemsize),
    )

    # Per-step VMEM: double-buffered in/out blocks + acc/intermediate headroom.
    vmem_est = (2 * khCin * Lk * 2 + 2 * kw * cout_tile * khCin * 2
                + kw * HW * 4 + 2 * cout_tile * HW * 4 + 3 * cout_tile * HW * 4)
    vmem_limit = int(min(48 * 1024 * 1024, max(32 * 1024 * 1024, 2 * vmem_est)))

    # TODO(synk): if H*W ever outgrows the un-tiled-HW VMEM budget, add an
    # 'arbitrary' HW grid axis with per-channel sum/sumsq scratch and a second
    # normalization sweep (a naive per-tile norm would be silently wrong); for
    # tiny Cout/HW, fold several batch images into the lane axis per step.
    out_flat = pl.pallas_call(
        kernel,
        out_shape=jax.ShapeDtypeStruct((N, Cout, HW), out_dtype),
        grid_spec=pltpu.PrefetchScalarGridSpec(
            num_scalar_prefetch=0,
            grid=(N, n_co),
            in_specs=[
                pl.BlockSpec((1, khCin, Lk), lambda n, co: (n, 0, 0)),
                pl.BlockSpec((kw, cout_tile, khCin), lambda n, co: (0, co, 0)),
                pl.BlockSpec((kw, 1, HW), lambda n, co: (0, 0, 0)),
            ],
            out_specs=pl.BlockSpec((1, cout_tile, HW), lambda n, co: (n, co, 0)),
        ),
        compiler_params=pltpu.CompilerParams(
            dimension_semantics=("parallel", "parallel"),
            vmem_limit_bytes=vmem_limit),
        cost_estimate=cost,
    )(gk, w3, masks)

    # [N, Cout, HW] -> [N, Cout, H, W]  (free reshape, no transpose)
    return out_flat.reshape(N, Cout, H, W)


def _reference(x, weight, bias):
    # pure-JAX reference (full f32, includes the conv bias) for sanity checking
    conv = lax.conv_general_dilated(
        x.astype(jnp.float32), weight.astype(jnp.float32),
        window_strides=(1, 1), padding="SAME",
        dimension_numbers=("NCHW", "OIHW", "NCHW"))
    conv = conv + bias.reshape(1, -1, 1, 1)
    mean = jnp.mean(conv, axis=(2, 3), keepdims=True)
    var = jnp.mean((conv - mean) ** 2, axis=(2, 3), keepdims=True)
    normed = (conv - mean) * lax.rsqrt(var + IN_EPS)
    return jnp.where(normed >= 0, normed, ALPHA_RELU * normed)


if __name__ == "__main__":
    key = jax.random.PRNGKey(0)
    N, Cin, H, W = 2, 4, 16, 16
    Cout, kh, kw = 8, 3, 3

    kx, kw_, kb = jax.random.split(key, 3)
    x = jax.random.normal(kx, (N, Cin, H, W), dtype=jnp.float32)
    fan_in = Cin * kh * kw
    bound = 1.0 / np.sqrt(fan_in)
    weight = jax.random.uniform(kw_, (Cout, Cin, kh, kw),
                                minval=-bound, maxval=bound, dtype=jnp.float32)
    bias = jax.random.uniform(kb, (Cout,), minval=-bound, maxval=bound,
                              dtype=jnp.float32)

    out = jax.block_until_ready(conv2d_layer(x, weight, bias))
    ref = jax.block_until_ready(_reference(x, weight, bias))

    # bf16 matmul operands -> looser tolerance than a pure-f32 path
    np.testing.assert_allclose(np.asarray(out), np.asarray(ref),
                               rtol=3e-2, atol=3e-2)
    print("KERNEL_OK")
</pallas_src>

<mosaic_0001>
module attributes {stable_mosaic.version = 11 : i64} {
  func.func @_conv_in_lrelu_kernel(%arg0: i32, %arg1: i32, %arg2: memref<1x12x258xbf16, #tpu.memory_space<vmem>>, %arg3: memref<3x8x12xbf16, #tpu.memory_space<vmem>>, %arg4: memref<3x1x256xf32, #tpu.memory_space<vmem>>, %arg5: memref<1x8x256xf32, #tpu.memory_space<vmem>>) attributes {dimension_semantics = [#tpu.dimension_semantics<parallel>, #tpu.dimension_semantics<parallel>], iteration_bounds = array<i64: 2, 1>, scalar_prefetch = 0 : i64, scratch_operands = 0 : i64, tpu.core_type = #tpu.core_type<tc>, window_params = [{transform_indices = @transform_0, window_bounds = array<i64: 1, 12, 258>}, {transform_indices = @transform_1, window_bounds = array<i64: 3, 8, 12>}, {pipeline_mode = #tpu.pipeline_mode<synchronous>, transform_indices = @transform_2, window_bounds = array<i64: 3, 1, 256>}, {transform_indices = @transform_3, window_bounds = array<i64: 1, 8, 256>}]} {
    %c0 = arith.constant 0 : index
    %c0_0 = arith.constant 0 : index
    %c0_1 = arith.constant 0 : index
    %0 = vector.load %arg2[%c0, %c0_0, %c0_1] : memref<1x12x258xbf16, #tpu.memory_space<vmem>>, vector<1x12x256xbf16>
    %1 = vector.shape_cast %0 : vector<1x12x256xbf16> to vector<12x256xbf16>
    %c0_2 = arith.constant 0 : index
    %c0_3 = arith.constant 0 : index
    %c0_4 = arith.constant 0 : index
    %2 = vector.load %arg3[%c0_2, %c0_3, %c0_4] : memref<3x8x12xbf16, #tpu.memory_space<vmem>>, vector<1x8x12xbf16>
    %3 = vector.shape_cast %2 : vector<1x8x12xbf16> to vector<8x12xbf16>
    %cst = arith.constant dense<0.000000e+00> : vector<8x256xf32>
    %4 = tpu.matmul %3, %1, %cst {dimension_numbers = #tpu.dot_dimension_numbers<[1], [0], [0], [1], [0, 0, 1, 1], [], []>} : vector<8x12xbf16>, vector<12x256xbf16>, vector<8x256xf32> -> vector<8x256xf32>
    %c0_5 = arith.constant 0 : index
    %c0_6 = arith.constant 0 : index
    %c0_7 = arith.constant 0 : index
    %5 = vector.load %arg4[%c0_5, %c0_6, %c0_7] : memref<3x1x256xf32, #tpu.memory_space<vmem>>, vector<1x1x256xf32>
    %6 = vector.shape_cast %5 : vector<1x1x256xf32> to vector<1x256xf32>
    %7 = vector.broadcast %6 : vector<1x256xf32> to vector<8x256xf32>
    %8 = arith.mulf %4, %7 : vector<8x256xf32>
    %c0_8 = arith.constant 0 : index
    %c0_9 = arith.constant 0 : index
    %c1 = arith.constant 1 : index
    %9 = vector.load %arg2[%c0_8, %c0_9, %c1] : memref<1x12x258xbf16, #tpu.memory_space<vmem>>, vector<1x12x256xbf16>
    %10 = vector.shape_cast %9 : vector<1x12x256xbf16> to vector<12x256xbf16>
    %c1_10 = arith.constant 1 : index
    %c0_11 = arith.constant 0 : index
    %c0_12 = arith.constant 0 : index
    %11 = vector.load %arg3[%c1_10, %c0_11, %c0_12] : memref<3x8x12xbf16, #tpu.memory_space<vmem>>, vector<1x8x12xbf16>
    %12 = vector.shape_cast %11 : vector<1x8x12xbf16> to vector<8x12xbf16>
    %cst_13 = arith.constant dense<0.000000e+00> : vector<8x256xf32>
    %13 = tpu.matmul %12, %10, %cst_13 {dimension_numbers = #tpu.dot_dimension_numbers<[1], [0], [0], [1], [0, 0, 1, 1], [], []>} : vector<8x12xbf16>, vector<12x256xbf16>, vector<8x256xf32> -> vector<8x256xf32>
    %14 = arith.addf %8, %13 : vector<8x256xf32>
    %c0_14 = arith.constant 0 : index
    %c0_15 = arith.constant 0 : index
    %c2 = arith.constant 2 : index
    %15 = vector.load %arg2[%c0_14, %c0_15, %c2] : memref<1x12x258xbf16, #tpu.memory_space<vmem>>, vector<1x12x256xbf16>
    %16 = vector.shape_cast %15 : vector<1x12x256xbf16> to vector<12x256xbf16>
    %c2_16 = arith.constant 2 : index
    %c0_17 = arith.constant 0 : index
    %c0_18 = arith.constant 0 : index
    %17 = vector.load %arg3[%c2_16, %c0_17, %c0_18] : memref<3x8x12xbf16, #tpu.memory_space<vmem>>, vector<1x8x12xbf16>
    %18 = vector.shape_cast %17 : vector<1x8x12xbf16> to vector<8x12xbf16>
    %cst_19 = arith.constant dense<0.000000e+00> : vector<8x256xf32>
    %19 = tpu.matmul %18, %16, %cst_19 {dimension_numbers = #tpu.dot_dimension_numbers<[1], [0], [0], [1], [0, 0, 1, 1], [], []>} : vector<8x12xbf16>, vector<12x256xbf16>, vector<8x256xf32> -> vector<8x256xf32>
    %c2_20 = arith.constant 2 : index
    %c0_21 = arith.constant 0 : index
    %c0_22 = arith.constant 0 : index
    %20 = vector.load %arg4[%c2_20, %c0_21, %c0_22] : memref<3x1x256xf32, #tpu.memory_space<vmem>>, vector<1x1x256xf32>
    %21 = vector.shape_cast %20 : vector<1x1x256xf32> to vector<1x256xf32>
    %22 = vector.broadcast %21 : vector<1x256xf32> to vector<8x256xf32>
    %23 = arith.mulf %19, %22 : vector<8x256xf32>
    %24 = arith.addf %14, %23 : vector<8x256xf32>
    %cst_23 = arith.constant dense<0.000000e+00> : vector<8xf32>
    %25 = vector.multi_reduction <add>, %24, %cst_23 [1] : vector<8x256xf32> to vector<8xf32>
    %26 = vector.shape_cast %25 : vector<8xf32> to vector<8x1xf32>
    %cst_24 = arith.constant 2.560000e+02 : f32
    %27 = vector.broadcast %cst_24 : f32 to vector<8x1xf32>
    %28 = arith.divf %26, %27 : vector<8x1xf32>
    %29 = vector.broadcast %28 : vector<8x1xf32> to vector<8x256xf32>
    %30 = arith.subf %24, %29 : vector<8x256xf32>
    %31 = arith.mulf %30, %30 : vector<8x256xf32>
    %cst_25 = arith.constant dense<0.000000e+00> : vector<8xf32>
    %32 = vector.multi_reduction <add>, %31, %cst_25 [1] : vector<8x256xf32> to vector<8xf32>
    %33 = vector.shape_cast %32 : vector<8xf32> to vector<8x1xf32>
    %cst_26 = arith.constant 2.560000e+02 : f32
    %34 = vector.broadcast %cst_26 : f32 to vector<8x1xf32>
    %35 = arith.divf %33, %34 : vector<8x1xf32>
    %cst_27 = arith.constant 9.99999974E-6 : f32
    %36 = vector.broadcast %cst_27 : f32 to vector<8x1xf32>
    %37 = arith.addf %35, %36 : vector<8x1xf32>
    %38 = math.rsqrt %37 : vector<8x1xf32>
    %39 = vector.broadcast %38 : vector<8x1xf32> to vector<8x256xf32>
    %40 = arith.mulf %30, %39 : vector<8x256xf32>
    %cst_28 = arith.constant 0.000000e+00 : f32
    %41 = vector.broadcast %cst_28 : f32 to vector<8x256xf32>
    %42 = arith.cmpf oge, %40, %41 : vector<8x256xf32>
    %cst_29 = arith.constant 1.500000e-01 : f32
    %43 = vector.broadcast %cst_29 : f32 to vector<8x256xf32>
    %44 = arith.mulf %43, %40 : vector<8x256xf32>
    %45 = arith.select %42, %40, %44 : vector<8x256xi1>, vector<8x256xf32>
    %c0_30 = arith.constant 0 : index
    %c0_31 = arith.constant 0 : index
    %c0_32 = arith.constant 0 : index
    %46 = vector.load %arg5[%c0_30, %c0_31, %c0_32] : memref<1x8x256xf32, #tpu.memory_space<vmem>>, vector<1x8x256xf32>
    %47 = vector.shape_cast %46 : vector<1x8x256xf32> to vector<8x256xf32>
    %48 = vector.shape_cast %45 : vector<8x256xf32> to vector<1x8x256xf32>
    tpu.vector_store %arg5[%c0_30, %c0_31, %c0_32], %48 {strides = array<i32>} : memref<1x8x256xf32, #tpu.memory_space<vmem>>, vector<1x8x256xf32>,
    return
  }
  func.func @transform_0(%arg0: i32, %arg1: i32) -> (i32, i32, i32) {
    %c0_i32 = arith.constant 0 : i32
    %c0_i32_0 = arith.constant 0 : i32
    %c0_i32_1 = arith.constant 0 : i32
    return %arg0, %c0_i32, %c0_i32_0 : i32, i32, i32
  }
  func.func @transform_1(%arg0: i32, %arg1: i32) -> (i32, i32, i32) {
    %c0_i32 = arith.constant 0 : i32
    %c0_i32_0 = arith.constant 0 : i32
    %c0_i32_1 = arith.constant 0 : i32
    return %c0_i32, %arg1, %c0_i32_0 : i32, i32, i32
  }
  func.func @transform_2(%arg0: i32, %arg1: i32) -> (i32, i32, i32) {
    %c0_i32 = arith.constant 0 : i32
    %c0_i32_0 = arith.constant 0 : i32
    %c0_i32_1 = arith.constant 0 : i32
    %c0_i32_2 = arith.constant 0 : i32
    return %c0_i32, %c0_i32_0, %c0_i32_1 : i32, i32, i32
  }
  func.func @transform_3(%arg0: i32, %arg1: i32) -> (i32, i32, i32) {
    %c0_i32 = arith.constant 0 : i32
    %c0_i32_0 = arith.constant 0 : i32
    return %arg0, %arg1, %c0_i32 : i32, i32, i32
  }
}

</mosaic_0001>

<llo_original>
// kernel: tpu_custom_call.1
$region0: #{tpu_custom_call.1}
  #allocation0 [shape = 'u32[]', space=smem, size = 0x4, offset = 0x4, fixed_abs, tag = 'smem constant byte address 0x4 - core index']
  #allocation1 [shape = 'u32[144,128]{1,0:T(1,128)}', space=vmem, size = 0x12000, scoped, tag = 'internal scratch']
  %s0 = inlined_call_operand.vmem [shape: bf16[2,12,258], index: 0, kind: input, shape index: {}]
  %s1 = inlined_call_operand.vmem [shape: bf16[3,8,12], index: 1, kind: input, shape index: {}]
  %s2 = inlined_call_operand.vmem [shape: f32[3,1,256], index: 2, kind: input, shape index: {}]
  %s3 = inlined_call_operand.hbm [shape: f32[2,8,256], index: 3, kind: output, shape index: {}]
  %s4 = sld [smem:[#allocation0]]
  $region45: #{tpu_custom_call.1} parent=0
    _
  %s6 = ssub.s32 1, %s4
  %s7 = scalar_select 0, %s6, %s4
  $region1: #{tpu_custom_call.1} parent=0
    #allocation2 [shape = 'u8[16384]{0}', space=vmem, size = 0x4000, scoped, tag = 'output window, operand 0']
    #allocation3 [shape = 's32[2]{0}', space=sflag, size = 0x8, scoped, tag = 'scoped memory for tpu_custom_call.1']
    %8 = vsyncpa [#allocation3], 0
    %s9 = scalar_lea.sflag [#allocation3], 1
    %10 = vsyncpa %s9, 0
    loop: start=0, step=1, limit=4
    $region2: #{tpu_custom_call.1} parent=1 // loop_pre_header
      _
    $region3: #{tpu_custom_call.1} parent=1 // loop_header
      %s12 = sphi 0, %s16
      %p13 = scmp.ge.s32.totalorder %s12, 4
      %s19 = sphi 0, %s31
      %s20 = sphi 0, %s27
      %s21 = sphi 0, %s19
      %s22 = sphi 0, %s20
      %s23 = sphi 0, %s21
      %s24 = sphi 0, %s22
      %s34 = sphi 0, %s36
      %s37 = sphi 0, %s34
      %s38 = sphi 0, %s37
      %s54 = sphi 0, %s38
      %s60 = sphi 0, %s62
      %s63 = sphi 0, %s60
      %s64 = sphi 0, %s63
      %s80 = sphi 0, %s64
      %s84 = sphi 0, %s84
      %s86 = sphi 0, %s84
      %s87 = sphi 0, %s86
      %s101 = sphi 0, %s87
      %s109 = sphi 0, %s111
      %s112 = sphi 0, %s109
      %s113 = sphi 0, %s112
      %s129 = sphi 0, %s113
    $region4: #{tpu_custom_call.1} parent=1 // loop_header_branch
      %15 = sbr.rel (%p13) target = $region8
    $region5: #{tpu_custom_call.1} parent=1 // loop_body
      %s17 = ssub.s32 %s12, 1
      %s18 = ssub.s32 %s12, 2
      %s25 = sadd.s32 1, %s20
      %p26 = scmp.ge.s32.totalorder %s25, 1
      %s27 = scalar_select %p26, 0, %s25
      %s28 = sadd.s32 1, %s19
      %s29 = scalar_select %p26, %s28, %s19
      %p30 = scmp.ge.s32.totalorder %s29, 2
      %s31 = scalar_select %p30, 0, %s29
      %s32 = ssub.s32 %s19, %s31
      %p33 = scmp.eq.s32.totalorder %s32, 0
      %s35 = sadd.s32 %s34, 1
      %s36 = scalar_select %p33, %s34, %s35
      %p39 = pneg %p33
      %p40 = scmp.eq.s32.totalorder %s12, 1
      %p41 = por %p39, %p40
      %p42 = scmp.ne.s32.totalorder %s34, %s37
      %p43 = scmp.eq.s32.totalorder %s12, 0
      %p44 = por %p42, %p43
      %p45 = scmp.ne.s32.totalorder %s34, %s37
      %p46 = scmp.eq.s32.totalorder %s17, 1
      %p47 = por %p45, %p46
      %p48 = scmp.ne.s32.totalorder %s37, %s38
      %p49 = scmp.eq.s32.totalorder %s17, 0
      %p50 = por %p48, %p49
      %p51 = scmp.ne.s32.totalorder %s37, %s38
      %p52 = scmp.eq.s32.totalorder %s18, 1
      %p53 = por %p51, %p52
      %p55 = scmp.ne.s32.totalorder %s38, %s54
      %p56 = scmp.eq.s32.totalorder %s18, 0
      %p57 = por %p55, %p56
      %s58 = ssub.s32 %s20, %s27
      %p59 = scmp.eq.s32.totalorder %s58, 0
      %s61 = sadd.s32 %s60, 1
      %s62 = scalar_select %p59, %s60, %s61
      %p65 = pneg %p59
      %p66 = scmp.eq.s32.totalorder %s12, 1
      %p67 = por %p65, %p66
      %p68 = scmp.ne.s32.totalorder %s60, %s63
      %p69 = scmp.eq.s32.totalorder %s12, 0
      %p70 = por %p68, %p69
      %p71 = scmp.ne.s32.totalorder %s60, %s63
      %p72 = scmp.eq.s32.totalorder %s17, 1
      %p73 = por %p71, %p72
      %p74 = scmp.ne.s32.totalorder %s63, %s64
      %p75 = scmp.eq.s32.totalorder %s17, 0
      %p76 = por %p74, %p75
      %p77 = scmp.ne.s32.totalorder %s63, %s64
      %p78 = scmp.eq.s32.totalorder %s18, 1
      %p79 = por %p77, %p78
      %p81 = scmp.ne.s32.totalorder %s64, %s80
      %p82 = scmp.eq.s32.totalorder %s18, 0
      %p83 = por %p81, %p82
      %s85 = sadd.s32 %s84, 1
      %p88 = scmp.eq.s32.totalorder %s12, 1
      %p89 = scmp.ne.s32.totalorder %s84, %s86
      %p90 = scmp.eq.s32.totalorder %s12, 0
      %p91 = por %p89, %p90
      %p92 = scmp.ne.s32.totalorder %s84, %s86
      %p93 = scmp.eq.s32.totalorder %s17, 1
      %p94 = por %p92, %p93
      %p95 = scmp.ne.s32.totalorder %s86, %s87
      %p96 = scmp.eq.s32.totalorder %s17, 0
      %p97 = por %p95, %p96
      %p98 = scmp.ne.s32.totalorder %s86, %s87
      %p99 = scmp.eq.s32.totalorder %s18, 1
      %p100 = por %p98, %p99
      %p102 = scmp.ne.s32.totalorder %s87, %s101
      %p103 = scmp.eq.s32.totalorder %s18, 0
      %p104 = por %p102, %p103
      %s105 = ssub.s32 %s19, %s31
      %s106 = ssub.s32 %s20, %s27
      %s107 = sor.u32 %s105, %s106
      %p108 = scmp.eq.s32.totalorder %s107, 0
      %s110 = sadd.s32 %s109, 1
      %s111 = scalar_select %p108, %s109, %s110
      %p114 = pneg %p108
      %p115 = scmp.eq.s32.totalorder %s12, 1
      %p116 = por %p114, %p115
      %p117 = scmp.ne.s32.totalorder %s109, %s112
      %p118 = scmp.eq.s32.totalorder %s12, 0
      %p119 = por %p117, %p118
      %p120 = scmp.ne.s32.totalorder %s109, %s112
      %p121 = scmp.eq.s32.totalorder %s17, 1
      %p122 = por %p120, %p121
      %p123 = scmp.ne.s32.totalorder %s112, %s113
      %p124 = scmp.eq.s32.totalorder %s17, 0
      %p125 = por %p123, %p124
      %p126 = scmp.ne.s32.totalorder %s112, %s113
      %p127 = scmp.eq.s32.totalorder %s18, 1
      %p128 = por %p126, %p127
      %p130 = scmp.ne.s32.totalorder %s113, %s129
      %p131 = scmp.eq.s32.totalorder %s18, 0
      %p132 = por %p130, %p131
      %p133 = scmp.le.s32.totalorder 1, %s12
      %p134 = scmp.lt.s32.totalorder %s12, 3
      %p135 = pnand %p133, %p134
      %p136 = pneg %p135
      // Predicated region
      $region9: #{tpu_custom_call.1} parent=5 // pred_check
        _
      $region10: #{tpu_custom_call.1} parent=5 // pred_check_branch
        %138 = sbr.rel (%p135) target = $region12
      $region11: #{tpu_custom_call.1} parent=5 // pred_region
        %s139 = ssub.s32 %s12, 1
        // Predicated region
        $region13: #{tpu_custom_call.1} parent=11 // pred_check
          %p140 = pneg %p76
        $region14: #{tpu_custom_call.1} parent=11 // pred_check_branch
          %142 = sbr.rel (%p140) target = $region16
        $region15: #{tpu_custom_call.1} parent=11 // pred_region
          %p143 = scmp.lt.s32.totalorder %s22, 0
          %s144 = scalar_select %p143, %s22, 0
          %s145 = smul.addr %s144, 4
          %s146 = scalar_lea.vmem %s1, %s145
        $region16: #{tpu_custom_call.1} parent=11 // pred_fallthru
          _
        // Predicated region
        $region17: #{tpu_custom_call.1} parent=11 // pred_check
          %p147 = pneg %p97
        $region18: #{tpu_custom_call.1} parent=11 // pred_check_branch
          %149 = sbr.rel (%p147) target = $region20
        $region19: #{tpu_custom_call.1} parent=11 // pred_region
          _
        $region20: #{tpu_custom_call.1} parent=11 // pred_fallthru
          _
      $region12: #{tpu_custom_call.1} parent=5 // pred_fallthru
        _
      %p150 = scmp.lt.s32.totalorder %s12, 2
      // Predicated region
      $region21: #{tpu_custom_call.1} parent=5 // pred_check
        %p151 = pneg %p150
      $region22: #{tpu_custom_call.1} parent=5 // pred_check_branch
        %153 = sbr.rel (%p151) target = $region24
      $region23: #{tpu_custom_call.1} parent=5 // pred_region
        // Predicated region
        $region25: #{tpu_custom_call.1} parent=23 // pred_check
          %p154 = pneg %p44
        $region26: #{tpu_custom_call.1} parent=23 // pred_check_branch
          %156 = sbr.rel (%p154) target = $region28
        $region27: #{tpu_custom_call.1} parent=23 // pred_region
          %p157 = scmp.lt.s32.totalorder %s19, 1
          %s158 = scalar_select %p157, %s19, 1
          %s159 = smul.addr %s158, 6
          %s160 = smul.addr %s159, 4
          %s161 = scalar_lea.vmem %s0, %s160
        $region28: #{tpu_custom_call.1} parent=23 // pred_fallthru
          _
      $region24: #{tpu_custom_call.1} parent=5 // pred_fallthru
        _
      %p162 = scmp.le.s32.totalorder 1, %s12
      %p163 = scmp.lt.s32.totalorder %s12, 3
      %p164 = pnand %p162, %p163
      %p165 = pneg %p164
      // Predicated region
      $region29: #{tpu_custom_call.1} parent=5 // pred_check
        _
      $region30: #{tpu_custom_call.1} parent=5 // pred_check_branch
        %167 = sbr.rel (%p164) target = $region32
      $region31: #{tpu_custom_call.1} parent=5 // pred_region
        %s168 = ssub.s32 %s12, 1
        %p169 = scmp.lt.s32.totalorder %s21, 1
        %s170 = scalar_select %p169, %s21, 1
        %s171 = smul.addr %s170, 6
        %s172 = smul.addr %s171, 4
        %s173 = scalar_lea.vmem %s0, %s172
        %p174 = pneg %p50
        %p175 = pneg %p47
        %p176 = scmp.lt.s32.totalorder %s22, 0
        %s177 = scalar_select %p176, %s22, 0
        %s178 = smul.addr %s177, 4
        %s179 = scalar_lea.vmem %s1, %s178
        %p180 = pneg %p76
        %p181 = pneg %p73
        %p182 = pneg %p97
        %p183 = pneg %p94
        %p184 = pneg %p125
        %p185 = pneg %p122
        %s186 = sand.u32 %s112, 1
        %s187 = scalar_lea.sflag [#allocation3], %s186
        %s188 = sand.u32 %s112, 1
        %s189 = smul.addr %s188, 16
        %s190 = scalar_lea.vmem [#allocation2], %s189
        %p191 = scmp.lt.s32.totalorder %s21, 1
        %s192 = scalar_select %p191, %s21, 1
        %s193 = smul.addr %s192, 6
        %s194 = smul.addr %s193, 4
        %s195 = scalar_lea.vmem %s0, %s194
        %p196 = scmp.lt.s32.totalorder %s22, 0
        %s197 = scalar_select %p196, %s22, 0
        %s198 = smul.addr %s197, 4
        %s199 = scalar_lea.vmem %s1, %s198
        %v201 = vld [vmem:[%s195] sm:$0xff]
        %v202 = vld [vmem:[%s195 + $0xc] sm:$0x33]
        %v203 = vld [vmem:[%s199] sm:$0xf]
        %v206 = vunpack.c.l.b16 %v201
        %v207 = vunpack.c.h.b16 %v201
        %v208 = vunpack.c.l.b16 %v202
        %v209 = vunpack.c.h.b16 %v202
        %v210 = vpack.c.b16 %v208, %v206
        %v211 = vpack.c.b16 %v209, %v207
        %vm212 = vcmask 97280
        %v214 = vsel %vm212, %v203, 0
        %vm216 = vcmask 1045504
        %v218 = vsel %vm216, %v210, 0
        %v221 = vsel %vm216, %v211, 0
        %223 = vmatprep.subr.bf16.mxu0 %v221
        %224 = vmatpush1.bf16.msra.mxu0 %v218
        %225 = vmatprep.subr.bf16.mxu0 0
        %226 = vmatpush1.bf16.msra.mxu0 0
        %227 = vmatprep.subr.bf16.mxu0 0
        %228 = vmatpush1.bf16.msra.mxu0 0
        %229 = vmatprep.subr.bf16.mxu0 0
        %230 = vmatpush1.bf16.msra.mxu0 0
        %231 = vmatprep.subr.bf16.mxu0 0
        %232 = vmatpush1.bf16.msra.mxu0 0
        %233 = vmatprep.subr.bf16.mxu0 0
        %234 = vmatpush1.bf16.msra.mxu0 0
        %235 = vmatprep.subr.bf16.mxu0 0
        %236 = vmatpush1.bf16.msra.mxu0 0
        %237 = vmatprep.subr.bf16.mxu0 0
        %238 = vmatpush1.bf16.msra.mxu0 0
        %239 = vmatprep.subr.bf16.mxu0 0
        %240 = vmatpush1.bf16.msra.mxu0 0
        %241 = vmatprep.subr.bf16.mxu0 0
        %242 = vmatpush1.bf16.msra.mxu0 0
        %243 = vmatprep.subr.bf16.mxu0 0
        %244 = vmatpush1.bf16.msra.mxu0 0
        %245 = vmatprep.subr.bf16.mxu0 0
        %246 = vmatpush1.bf16.msra.mxu0 0
        %247 = vmatprep.subr.bf16.mxu0 0
        %248 = vmatpush1.bf16.msra.mxu0 0
        %249 = vmatprep.subr.bf16.mxu0 0
        %250 = vmatpush1.bf16.msra.mxu0 0
        %251 = vmatprep.subr.bf16.mxu0 0
        %252 = vmatpush1.bf16.msra.mxu0 0
        %253 = vmatprep.subr.bf16.mxu0 0
        %254 = vmatpush1.bf16.msra.mxu0 0
        %255 = vmatprep.mubr.bf16.mxu0 0
        %256 = vmatmul.mubr.bf16.gmra.mrb[0].mxu0 %v214
        %v257 = vpop.f32.mrb[0].mxu0
        %v258 = vadd.f32 0.0, %v257
        %v259 = vpop.f32.mrb[0].mxu0
        %v260 = vadd.f32 0.0, %v259
        %v261 = vpop.f32.mrb[0].mxu0
        %v262 = vpop.f32.mrb[0].mxu0
        %263 = vdwg.mxu0
        %v264 = vld [vmem:[%s2] sm:$0x3]
        %v266 = vlaneseq
        %v267 = vshrl.u32 %v266, 7
        %v268 = vsub.s32 0, %v267
        %v269 = vrot.slane %v264, %v268
        %v270 = vlaneseq
        %v271 = vshrl.u32 %v270, 7
        %v272 = vsub.s32 1, %v271
        %v273 = vrot.slane %v264, %v272
        %v276 = vmul.f32 %v258, %v269
        %v277 = vmul.f32 %v260, %v273
        %v278 = vld [vmem:[%s195] sm:$0xff]
        %v279 = vld [vmem:[%s195 + $0x8] sm:$0xf]
        %v280 = vld [vmem:[%s195 + $0xc] sm:$0x33]
        %v281 = vld [vmem:[%s195 + $0x14] sm:$0x3]
        %s282 = scalar_lea.vmem %s199, 4
        %v283 = vld [vmem:[%s282] sm:$0xf]
        %v288 = vunpack.c.l.b16 %v278
        %v289 = vunpack.c.h.b16 %v278
        %v290 = vunpack.c.l.b16 %v279
        %v291 = vunpack.c.l.b16 %v280
        %v292 = vunpack.c.h.b16 %v280
        %v293 = vunpack.c.l.b16 %v281
        %v294 = vpack.c.b16 %v291, %v288
        %v295 = vpack.c.b16 %v292, %v289
        %v296 = vpack.c.b16 %v293, %v290
        %297 = vrot.lane.b32.xlu0 %v294, 127
        %v298 = vpop.permute.xlu0 %297
        %299 = vrot.lane.b32.xlu0 %v295, 127
        %v300 = vpop.permute.xlu0 %299
        %301 = vrot.lane.b32.xlu0 %v296, 127
        %v302 = vpop.permute.xlu0 %301
        %vm303 = vcmask 1039360
        %v304 = vsel %vm303, %v298, %v300
        %v305 = vsel %vm303, %v300, %v302
        %v307 = vsel %vm212, %v283, 0
        %v310 = vsel %vm216, %v304, 0
        %v313 = vsel %vm216, %v305, 0
        %315 = vmatprep.subr.bf16.mxu0 %v313
        %316 = vmatpush1.bf16.msra.mxu0 %v310
        %317 = vmatprep.subr.bf16.mxu0 0
        %318 = vmatpush1.bf16.msra.mxu0 0
        %319 = vmatprep.subr.bf16.mxu0 0
        %320 = vmatpush1.bf16.msra.mxu0 0
        %321 = vmatprep.subr.bf16.mxu0 0
        %322 = vmatpush1.bf16.msra.mxu0 0
        %323 = vmatprep.subr.bf16.mxu0 0
        %324 = vmatpush1.bf16.msra.mxu0 0
        %325 = vmatprep.subr.bf16.mxu0 0
        %326 = vmatpush1.bf16.msra.mxu0 0
        %327 = vmatprep.subr.bf16.mxu0 0
        %328 = vmatpush1.bf16.msra.mxu0 0
        %329 = vmatprep.subr.bf16.mxu0 0
        %330 = vmatpush1.bf16.msra.mxu0 0
        %331 = vmatprep.subr.bf16.mxu0 0
        %332 = vmatpush1.bf16.msra.mxu0 0
        %333 = vmatprep.subr.bf16.mxu0 0
        %334 = vmatpush1.bf16.msra.mxu0 0
        %335 = vmatprep.subr.bf16.mxu0 0
        %336 = vmatpush1.bf16.msra.mxu0 0
        %337 = vmatprep.subr.bf16.mxu0 0
        %338 = vmatpush1.bf16.msra.mxu0 0
        %339 = vmatprep.subr.bf16.mxu0 0
        %340 = vmatpush1.bf16.msra.mxu0 0
        %341 = vmatprep.subr.bf16.mxu0 0
        %342 = vmatpush1.bf16.msra.mxu0 0
        %343 = vmatprep.subr.bf16.mxu0 0
        %344 = vmatpush1.bf16.msra.mxu0 0
        %345 = vmatprep.subr.bf16.mxu0 0
        %346 = vmatpush1.bf16.msra.mxu0 0
        %347 = vmatprep.mubr.bf16.mxu0 0
        %348 = vmatmul.mubr.bf16.gmra.mrb[0].mxu0 %v307
        %v349 = vpop.f32.mrb[0].mxu0
        %v350 = vadd.f32 0.0, %v349
        %v351 = vpop.f32.mrb[0].mxu0
        %v352 = vadd.f32 0.0, %v351
        %v353 = vpop.f32.mrb[0].mxu0
        %v354 = vpop.f32.mrb[0].mxu0
        %355 = vdwg.mxu0
        %v356 = vadd.f32 %v276, %v350
        %v357 = vadd.f32 %v277, %v352
        %s358 = scalar_lea.vmem %s199, 8
        %v359 = vld [vmem:[%s358] sm:$0xf]
        %360 = vrot.lane.b32.xlu0 %v294, 126
        %v361 = vpop.permute.xlu0 %360
        %362 = vrot.lane.b32.xlu0 %v295, 126
        %v363 = vpop.permute.xlu0 %362
        %364 = vrot.lane.b32.xlu0 %v296, 126
        %v365 = vpop.permute.xlu0 %364
        %vm366 = vcmask 1031168
        %v367 = vsel %vm366, %v361, %v363
        %v368 = vsel %vm366, %v363, %v365
        %v370 = vsel %vm212, %v359, 0
        %v373 = vsel %vm216, %v367, 0
        %v376 = vsel %vm216, %v368, 0
        %378 = vmatprep.subr.bf16.mxu0 %v376
        %379 = vmatpush1.bf16.msra.mxu0 %v373
        %380 = vmatprep.subr.bf16.mxu0 0
        %381 = vmatpush1.bf16.msra.mxu0 0
        %382 = vmatprep.subr.bf16.mxu0 0
        %383 = vmatpush1.bf16.msra.mxu0 0
        %384 = vmatprep.subr.bf16.mxu0 0
        %385 = vmatpush1.bf16.msra.mxu0 0
        %386 = vmatprep.subr.bf16.mxu0 0
        %387 = vmatpush1.bf16.msra.mxu0 0
        %388 = vmatprep.subr.bf16.mxu0 0
        %389 = vmatpush1.bf16.msra.mxu0 0
        %390 = vmatprep.subr.bf16.mxu0 0
        %391 = vmatpush1.bf16.msra.mxu0 0
        %392 = vmatprep.subr.bf16.mxu0 0
        %393 = vmatpush1.bf16.msra.mxu0 0
        %394 = vmatprep.subr.bf16.mxu0 0
        %395 = vmatpush1.bf16.msra.mxu0 0
        %396 = vmatprep.subr.bf16.mxu0 0
        %397 = vmatpush1.bf16.msra.mxu0 0
        %398 = vmatprep.subr.bf16.mxu0 0
        %399 = vmatpush1.bf16.msra.mxu0 0
        %400 = vmatprep.subr.bf16.mxu0 0
        %401 = vmatpush1.bf16.msra.mxu0 0
        %402 = vmatprep.subr.bf16.mxu0 0
        %403 = vmatpush1.bf16.msra.mxu0 0
        %404 = vmatprep.subr.bf16.mxu0 0
        %405 = vmatpush1.bf16.msra.mxu0 0
        %406 = vmatprep.subr.bf16.mxu0 0
        %407 = vmatpush1.bf16.msra.mxu0 0
        %408 = vmatprep.subr.bf16.mxu0 0
        %409 = vmatpush1.bf16.msra.mxu0 0
        %410 = vmatprep.mubr.bf16.mxu0 0
        %411 = vmatmul.mubr.bf16.gmra.mrb[0].mxu0 %v370
        %v412 = vpop.f32.mrb[0].mxu0
        %v413 = vadd.f32 0.0, %v412
        %v414 = vpop.f32.mrb[0].mxu0
        %v415 = vadd.f32 0.0, %v414
        %v416 = vpop.f32.mrb[0].mxu0
        %v417 = vpop.f32.mrb[0].mxu0
        %418 = vdwg.mxu0
        %s419 = scalar_lea.vmem %s2, 4
        %v420 = vld [vmem:[%s419] sm:$0x3]
        %v422 = vlaneseq
        %v423 = vshrl.u32 %v422, 7
        %v424 = vsub.s32 0, %v423
        %v425 = vrot.slane %v420, %v424
        %v426 = vlaneseq
        %v427 = vshrl.u32 %v426, 7
        %v428 = vsub.s32 1, %v427
        %v429 = vrot.slane %v420, %v428
        %v432 = vmul.f32 %v413, %v425
        %v433 = vmul.f32 %v415, %v429
        %v434 = vadd.f32 %v356, %v432
        %v435 = vadd.f32 %v357, %v433
        %v436 = vadd.f32 %v434, %v435
        %437 = vadd.xlane.f32.xlu0 %v436
        %v438 = vpop.xlane.xlu0 %437
        %v439 = vrcp.pop 256.0
        %v440 = vmul.f32 %v438, %v439
        %v441 = vsub.f32 %v434, %v440
        %v442 = vsub.f32 %v435, %v440
        %v443 = vmul.f32 %v441, %v441
        %v444 = vmul.f32 %v442, %v442
        %v445 = vadd.f32 %v443, %v444
        %446 = vadd.xlane.f32.xlu0 %v445
        %v447 = vpop.xlane.xlu0 %446
        %v448 = vmul.f32 %v447, %v439
        %v449 = vadd.f32 %v448, 1e-05
        %v450 = vrsqrt.pop %v449
        %v451 = vmul.f32 %v441, %v450
        %v452 = vmul.f32 %v442, %v450
        %vm453 = vcmp.ge.f32.partialorder %v451, 0.0
        %vm454 = vcmp.ge.f32.partialorder %v452, 0.0
        %v455 = vmul.f32 %v451, 0.15
        %v456 = vmul.f32 %v452, 0.15
        %v457 = vsel %vm453, %v451, %v455
        %v458 = vsel %vm454, %v452, %v456
        %459 = vst [vmem:[%s190] sm:$0xff] %v457
        %460 = vst [vmem:[%s190 + $0x8] sm:$0xff] %v458
        %s461 = sand.u32 %s112, 1
        %s462 = scalar_lea.sflag [#allocation3], %s461
        %s463 = sand.u32 %s112, 1
        %s464 = smul.addr %s463, 16
        %s465 = scalar_lea.vmem [#allocation2], %s464
        // Predicated region
        $region33: #{tpu_custom_call.1} parent=31 // pred_check
          %p466 = pneg %p122
        $region34: #{tpu_custom_call.1} parent=31 // pred_check_branch
          %468 = sbr.rel (%p466) target = $region36
        $region35: #{tpu_custom_call.1} parent=31 // pred_region
          %s470 = ssub.s32 256, 256
          %471 = vsyncadd %s462, %s470
          %s472 = smul.addr %s22, 2
          %s473 = smul.addr %s21, 2
          %s474 = sadd.s32 %s472, %s473
          %s475 = smul.addr %s474, 128
          %s476 = scalar_lea.hbm %s3, %s475
          %s478 = sshll.u32 %s465, 4
          %s479 = int_to_ptr.vmem [resolvable:$true] %s478
          %481 = dma.vmem_to_hbm [thread:$0]  %s479, 256, %s476, %s462
        $region36: #{tpu_custom_call.1} parent=31 // pred_fallthru
          _
      $region32: #{tpu_custom_call.1} parent=5 // pred_fallthru
        _
      %p482 = scmp.le.s32.totalorder 2, %s12
      // Predicated region
      $region37: #{tpu_custom_call.1} parent=5 // pred_check
        %p483 = pneg %p482
      $region38: #{tpu_custom_call.1} parent=5 // pred_check_branch
        %485 = sbr.rel (%p483) target = $region40
      $region39: #{tpu_custom_call.1} parent=5 // pred_region
        %s486 = ssub.s32 %s12, 2
        // Predicated region
        $region41: #{tpu_custom_call.1} parent=39 // pred_check
          %p487 = pneg %p128
        $region42: #{tpu_custom_call.1} parent=39 // pred_check_branch
          %489 = sbr.rel (%p487) target = $region44
        $region43: #{tpu_custom_call.1} parent=39 // pred_region
          %s490 = sand.u32 %s113, 1
          %s491 = scalar_lea.sflag [#allocation3], %s490
          %s492 = sand.u32 %s113, 1
          %s493 = smul.addr %s492, 16
          %s494 = scalar_lea.vmem [#allocation2], %s493
          %495 = dma.done %s491, 256
        $region44: #{tpu_custom_call.1} parent=39 // pred_fallthru
          _
      $region40: #{tpu_custom_call.1} parent=5 // pred_fallthru
        _
    $region6: #{tpu_custom_call.1} parent=1 // loop_footer
      %s16 = sadd.s32 1, %s12
    $region7: #{tpu_custom_call.1} parent=1 // loop_footer_branch
      %11 = sbr.rel target = $region3
    $region8: #{tpu_custom_call.1} parent=1 // loop_exit
      _
    %496 = vsyncpa [#allocation3], 1
    %s497 = scalar_lea.sflag [#allocation3], 1
    %498 = vsyncpa %s497, 1

</llo_original>
